<compile_context>
chip_gen: v7x
topology: tpu7x:2x2x1
jax: 0.10.0
libtpu: 0.0.40
codegen_flags: <defaults>
</compile_context>

<pallas_src>
import jax
import jax.numpy as jnp
from jax.experimental import pallas as pl
from jax.experimental.pallas import tpu as pltpu

_INV_SQRT2 = 0.7071067811865476


def _gelu_exact(x):
    # PyTorch nn.GELU() default: 0.5 * x * (1 + erf(x / sqrt(2)))
    return 0.5 * x * (1.0 + jax.lax.erf(x * _INV_SQRT2))


def _make_skff_kernel(height):
    def kernel(*refs):
        # refs: height branch refs (C, HW), wdu_ref (d, C), wfc_ref (height*C, d),
        #       o_ref (C, HW).  Batch dim is squeezed out by the BlockSpec.
        x_refs = refs[:height]
        wdu_ref = refs[height]
        wfc_ref = refs[height + 1]
        o_ref = refs[height + 2]
        C, HW = o_ref.shape

        # ---- squeeze path (tiny; f32) -------------------------------------
        # Pooled mean of feats_U without materializing feats_U:
        # lane (XLU) reduction per branch, then add the (C, 1) columns.
        pooled = jnp.sum(x_refs[0][...].astype(jnp.float32), axis=-1, keepdims=True)
        for h in range(1, height):
            pooled = pooled + jnp.sum(
                x_refs[h][...].astype(jnp.float32), axis=-1, keepdims=True)
        pooled = pooled * (1.0 / HW)                                # (C, 1)

        # conv_du (1x1, C->d, no bias) + exact GELU.
        z = jnp.dot(wdu_ref[...], pooled, preferred_element_type=jnp.float32)  # (d, 1)
        z = _gelu_exact(z)

        # All `height` fc branches with one matmul -> (height*C, 1).
        logits = jnp.dot(wfc_ref[...], z, preferred_element_type=jnp.float32)
        lg = [logits[h * C:(h + 1) * C] for h in range(height)]     # (C, 1) each

        # Softmax over the branch axis (unrolled, max-subtracted).
        m = lg[0]
        for h in range(1, height):
            m = jnp.maximum(m, lg[h])
        ex = [jnp.exp(v - m) for v in lg]
        den = ex[0]
        for h in range(1, height):
            den = den + ex[h]
        inv_den = 1.0 / den                                          # (C, 1)
        att = [e * inv_den for e in ex]                              # (C, 1) each

        # ---- per-pixel path: lane-broadcast FMA over (C, HW) ---------------
        acc = att[0] * x_refs[0][...].astype(jnp.float32)
        for h in range(1, height):
            acc = acc + att[h] * x_refs[h][...].astype(jnp.float32)
        o_ref[...] = acc.astype(o_ref.dtype)

    return kernel


def skff_forward(inp_feats, w_du, w_fcs):
    """inp_feats: list of `height` arrays (B, C, H, W). w_du: (d, C). w_fcs: list of (C, d)."""
    height = len(inp_feats)
    B, C, H, W = inp_feats[0].shape
    HW = H * W
    d = w_du.shape[0]
    dtype = inp_feats[0].dtype
    itemsize = jnp.dtype(dtype).itemsize

    # Free contiguous reshape views — no HBM copy, no stack.
    xs = [f.reshape(B, C, HW) for f in inp_feats]

    # Tiny per-batch weights, f32, VMEM-resident across all grid steps.
    wdu = w_du.astype(jnp.float32)                                   # (d, C)
    wfc = jnp.concatenate([w.astype(jnp.float32) for w in w_fcs], 0)  # (height*C, d)

    # Per-step VMEM footprint (in + out blocks, double-buffered) -> scoped limit.
    per_step_bytes = (height + 1) * C * HW * itemsize
    vmem_limit = int(min(100 * 2**20, max(32 * 2**20, 4 * per_step_bytes)))

    cost = pl.CostEstimate(
        flops=int((2 * height + 2) * B * C * HW + 4 * B * C * d * (height + 1)),
        transcendentals=int(B * (d + height * C)),
        bytes_accessed=int((height + 1) * B * C * HW * itemsize
                           + (C * d + height * C * d) * 4),
    )

    branch_spec = pl.BlockSpec((pl.Squeezed(), C, HW), lambda b: (b, 0, 0))

    out = pl.pallas_call(
        _make_skff_kernel(height),
        out_shape=jax.ShapeDtypeStruct((B, C, HW), dtype),
        grid=(B,),
        in_specs=[branch_spec for _ in range(height)]
                + [pl.BlockSpec((d, C), lambda b: (0, 0)),
                   pl.BlockSpec((height * C, d), lambda b: (0, 0))],
        out_specs=pl.BlockSpec((pl.Squeezed(), C, HW), lambda b: (b, 0, 0)),
        compiler_params=pltpu.CompilerParams(
            dimension_semantics=("parallel",),
            vmem_limit_bytes=vmem_limit),
        cost_estimate=cost,
    )(*xs, wdu, wfc)

    return out.reshape(B, C, H, W)


def _reference(inp_feats, w_du, w_fcs):
    """Pure-JAX reference matching the PyTorch SKFF.forward."""
    x = jnp.stack(inp_feats, axis=1)                       # (B, height, C, H, W)
    feats_u = jnp.sum(x, axis=1)                           # (B, C, H, W)
    s = jnp.mean(feats_u, axis=(2, 3))                     # (B, C)
    z = jnp.einsum('dc,bc->bd', w_du, s)
    z = _gelu_exact(z)
    att = jnp.stack([jnp.einsum('cd,bd->bc', w, z) for w in w_fcs], axis=1)  # (B, height, C)
    att = jax.nn.softmax(att, axis=1)
    return jnp.sum(x * att[:, :, :, None, None], axis=1)


if __name__ == "__main__":
    # Small shapes consistent with the module: in_channels=4, height=3, reduction=3.
    B, C, H, W = 2, 4, 16, 16
    height, reduction = 3, 3
    d = max(int(C / reduction), 3)                         # = 3 (as in the PyTorch __init__)

    key = jax.random.PRNGKey(0)
    keys = jax.random.split(key, height + 2)
    inp_feats = [jax.random.normal(keys[i], (B, C, H, W), dtype=jnp.float32)
                 for i in range(height)]

    # conv_du: Conv2d(C, d, 1, bias=False)  -> weight (d, C)
    w_du = jax.random.normal(keys[height], (d, C), dtype=jnp.float32) * (1.0 / jnp.sqrt(C))
    # fcs[h]: Conv2d(d, C, 1, bias=False)   -> weight (C, d) each
    w_fcs = [jax.random.normal(jax.random.fold_in(keys[height + 1], h), (C, d),
                               dtype=jnp.float32) * (1.0 / jnp.sqrt(d))
             for h in range(height)]
    # NOTE: res_conv exists in __init__ but is never used in forward -> not materialized.

    out = skff_forward(inp_feats, w_du, w_fcs)
    out = jax.block_until_ready(out)

    ref = _reference(inp_feats, w_du, w_fcs)
    assert out.shape == (B, C, H, W)
    assert jnp.allclose(out, ref, atol=1e-4, rtol=1e-4), \
        f"max abs err {jnp.max(jnp.abs(out - ref))}"

    print("KERNEL_OK")
</pallas_src>

<mosaic_0001>
module attributes {stable_mosaic.version = 11 : i64} {
  func.func @kernel(%arg0: i32, %arg1: memref<1x4x256xf32, #tpu.memory_space<vmem>>, %arg2: memref<1x4x256xf32, #tpu.memory_space<vmem>>, %arg3: memref<1x4x256xf32, #tpu.memory_space<vmem>>, %arg4: memref<3x4xf32, #tpu.memory_space<vmem>>, %arg5: memref<12x3xf32, #tpu.memory_space<vmem>>, %arg6: memref<1x4x256xf32, #tpu.memory_space<vmem>>) attributes {dimension_semantics = [#tpu.dimension_semantics<parallel>], iteration_bounds = array<i64: 2>, scalar_prefetch = 0 : i64, scratch_operands = 0 : i64, tpu.core_type = #tpu.core_type<tc>, window_params = [{transform_indices = @transform_0, window_bounds = array<i64: 1, 4, 256>}, {transform_indices = @transform_1, window_bounds = array<i64: 1, 4, 256>}, {transform_indices = @transform_2, window_bounds = array<i64: 1, 4, 256>}, {pipeline_mode = #tpu.pipeline_mode<synchronous>, transform_indices = @transform_3, window_bounds = array<i64: 3, 4>}, {pipeline_mode = #tpu.pipeline_mode<synchronous>, transform_indices = @transform_4, window_bounds = array<i64: 12, 3>}, {transform_indices = @transform_5, window_bounds = array<i64: 1, 4, 256>}]} {
    %c0 = arith.constant 0 : index
    %c0_0 = arith.constant 0 : index
    %c0_1 = arith.constant 0 : index
    %0 = vector.load %arg1[%c0, %c0_0, %c0_1] : memref<1x4x256xf32, #tpu.memory_space<vmem>>, vector<1x4x256xf32>
    %1 = vector.shape_cast %0 : vector<1x4x256xf32> to vector<4x256xf32>
    %cst = arith.constant dense<0.000000e+00> : vector<4xf32>
    %2 = vector.multi_reduction <add>, %1, %cst [1] : vector<4x256xf32> to vector<4xf32>
    %3 = vector.shape_cast %2 : vector<4xf32> to vector<4x1xf32>
    %c0_2 = arith.constant 0 : index
    %c0_3 = arith.constant 0 : index
    %c0_4 = arith.constant 0 : index
    %4 = vector.load %arg2[%c0_2, %c0_3, %c0_4] : memref<1x4x256xf32, #tpu.memory_space<vmem>>, vector<1x4x256xf32>
    %5 = vector.shape_cast %4 : vector<1x4x256xf32> to vector<4x256xf32>
    %cst_5 = arith.constant dense<0.000000e+00> : vector<4xf32>
    %6 = vector.multi_reduction <add>, %5, %cst_5 [1] : vector<4x256xf32> to vector<4xf32>
    %7 = vector.shape_cast %6 : vector<4xf32> to vector<4x1xf32>
    %8 = arith.addf %3, %7 : vector<4x1xf32>
    %c0_6 = arith.constant 0 : index
    %c0_7 = arith.constant 0 : index
    %c0_8 = arith.constant 0 : index
    %9 = vector.load %arg3[%c0_6, %c0_7, %c0_8] : memref<1x4x256xf32, #tpu.memory_space<vmem>>, vector<1x4x256xf32>
    %10 = vector.shape_cast %9 : vector<1x4x256xf32> to vector<4x256xf32>
    %cst_9 = arith.constant dense<0.000000e+00> : vector<4xf32>
    %11 = vector.multi_reduction <add>, %10, %cst_9 [1] : vector<4x256xf32> to vector<4xf32>
    %12 = vector.shape_cast %11 : vector<4xf32> to vector<4x1xf32>
    %13 = arith.addf %8, %12 : vector<4x1xf32>
    %cst_10 = arith.constant 3.906250e-03 : f32
    %14 = vector.broadcast %cst_10 : f32 to vector<4x1xf32>
    %15 = arith.mulf %13, %14 : vector<4x1xf32>
    %c0_11 = arith.constant 0 : index
    %c0_12 = arith.constant 0 : index
    %16 = vector.load %arg4[%c0_11, %c0_12] : memref<3x4xf32, #tpu.memory_space<vmem>>, vector<3x4xf32>
    %cst_13 = arith.constant dense<0.000000e+00> : vector<3x1xf32>
    %17 = tpu.matmul %16, %15, %cst_13 {dimension_numbers = #tpu.dot_dimension_numbers<[1], [0], [0], [1], [0, 0, 1, 1], [], []>} : vector<3x4xf32>, vector<4x1xf32>, vector<3x1xf32> -> vector<3x1xf32>
    %cst_14 = arith.constant 5.000000e-01 : f32
    %18 = vector.broadcast %cst_14 : f32 to vector<3x1xf32>
    %19 = arith.mulf %18, %17 : vector<3x1xf32>
    %cst_15 = arith.constant 0.707106769 : f32
    %20 = vector.broadcast %cst_15 : f32 to vector<3x1xf32>
    %21 = arith.mulf %17, %20 : vector<3x1xf32>
    %22 = math.erf %21 : vector<3x1xf32>
    %cst_16 = arith.constant 1.000000e+00 : f32
    %23 = vector.broadcast %cst_16 : f32 to vector<3x1xf32>
    %24 = arith.addf %23, %22 : vector<3x1xf32>
    %25 = arith.mulf %19, %24 : vector<3x1xf32>
    %c0_17 = arith.constant 0 : index
    %c0_18 = arith.constant 0 : index
    %26 = vector.load %arg5[%c0_17, %c0_18] : memref<12x3xf32, #tpu.memory_space<vmem>>, vector<12x3xf32>
    %cst_19 = arith.constant dense<0.000000e+00> : vector<12x1xf32>
    %27 = tpu.matmul %26, %25, %cst_19 {dimension_numbers = #tpu.dot_dimension_numbers<[1], [0], [0], [1], [0, 0, 1, 1], [], []>} : vector<12x3xf32>, vector<3x1xf32>, vector<12x1xf32> -> vector<12x1xf32>
    %28 = vector.extract_strided_slice %27 {offsets = [0, 0], sizes = [4, 1], strides = [1, 1]} : vector<12x1xf32> to vector<4x1xf32>
    %29 = vector.extract_strided_slice %27 {offsets = [4, 0], sizes = [4, 1], strides = [1, 1]} : vector<12x1xf32> to vector<4x1xf32>
    %30 = vector.extract_strided_slice %27 {offsets = [8, 0], sizes = [4, 1], strides = [1, 1]} : vector<12x1xf32> to vector<4x1xf32>
    %31 = arith.maximumf %28, %29 : vector<4x1xf32>
    %32 = arith.maximumf %31, %30 : vector<4x1xf32>
    %33 = arith.subf %28, %32 : vector<4x1xf32>
    %34 = math.exp %33 : vector<4x1xf32>
    %35 = arith.subf %29, %32 : vector<4x1xf32>
    %36 = math.exp %35 : vector<4x1xf32>
    %37 = arith.subf %30, %32 : vector<4x1xf32>
    %38 = math.exp %37 : vector<4x1xf32>
    %39 = arith.addf %34, %36 : vector<4x1xf32>
    %40 = arith.addf %39, %38 : vector<4x1xf32>
    %cst_20 = arith.constant 1.000000e+00 : f32
    %41 = vector.broadcast %cst_20 : f32 to vector<4x1xf32>
    %42 = arith.divf %41, %40 : vector<4x1xf32>
    %43 = arith.mulf %34, %42 : vector<4x1xf32>
    %44 = arith.mulf %36, %42 : vector<4x1xf32>
    %45 = arith.mulf %38, %42 : vector<4x1xf32>
    %c0_21 = arith.constant 0 : index
    %c0_22 = arith.constant 0 : index
    %c0_23 = arith.constant 0 : index
    %46 = vector.load %arg1[%c0_21, %c0_22, %c0_23] : memref<1x4x256xf32, #tpu.memory_space<vmem>>, vector<1x4x256xf32>
    %47 = vector.shape_cast %46 : vector<1x4x256xf32> to vector<4x256xf32>
    %48 = vector.broadcast %43 : vector<4x1xf32> to vector<4x256xf32>
    %49 = arith.mulf %48, %47 : vector<4x256xf32>
    %c0_24 = arith.constant 0 : index
    %c0_25 = arith.constant 0 : index
    %c0_26 = arith.constant 0 : index
    %50 = vector.load %arg2[%c0_24, %c0_25, %c0_26] : memref<1x4x256xf32, #tpu.memory_space<vmem>>, vector<1x4x256xf32>
    %51 = vector.shape_cast %50 : vector<1x4x256xf32> to vector<4x256xf32>
    %52 = vector.broadcast %44 : vector<4x1xf32> to vector<4x256xf32>
    %53 = arith.mulf %52, %51 : vector<4x256xf32>
    %54 = arith.addf %49, %53 : vector<4x256xf32>
    %c0_27 = arith.constant 0 : index
    %c0_28 = arith.constant 0 : index
    %c0_29 = arith.constant 0 : index
    %55 = vector.load %arg3[%c0_27, %c0_28, %c0_29] : memref<1x4x256xf32, #tpu.memory_space<vmem>>, vector<1x4x256xf32>
    %56 = vector.shape_cast %55 : vector<1x4x256xf32> to vector<4x256xf32>
    %57 = vector.broadcast %45 : vector<4x1xf32> to vector<4x256xf32>
    %58 = arith.mulf %57, %56 : vector<4x256xf32>
    %59 = arith.addf %54, %58 : vector<4x256xf32>
    %c0_30 = arith.constant 0 : index
    %c0_31 = arith.constant 0 : index
    %c0_32 = arith.constant 0 : index
    %60 = vector.load %arg6[%c0_30, %c0_31, %c0_32] : memref<1x4x256xf32, #tpu.memory_space<vmem>>, vector<1x4x256xf32>
    %61 = vector.shape_cast %60 : vector<1x4x256xf32> to vector<4x256xf32>
    %62 = vector.shape_cast %59 : vector<4x256xf32> to vector<1x4x256xf32>
    tpu.vector_store %arg6[%c0_30, %c0_31, %c0_32], %62 {strides = array<i32>} : memref<1x4x256xf32, #tpu.memory_space<vmem>>, vector<1x4x256xf32>,
    return
  }
  func.func @transform_0(%arg0: i32) -> (i32, i32, i32) {
    %c0_i32 = arith.constant 0 : i32
    %c0_i32_0 = arith.constant 0 : i32
    %c0_i32_1 = arith.constant 0 : i32
    return %arg0, %c0_i32, %c0_i32_0 : i32, i32, i32
  }
  func.func @transform_1(%arg0: i32) -> (i32, i32, i32) {
    %c0_i32 = arith.constant 0 : i32
    %c0_i32_0 = arith.constant 0 : i32
    %c0_i32_1 = arith.constant 0 : i32
    return %arg0, %c0_i32, %c0_i32_0 : i32, i32, i32
  }
  func.func @transform_2(%arg0: i32) -> (i32, i32, i32) {
    %c0_i32 = arith.constant 0 : i32
    %c0_i32_0 = arith.constant 0 : i32
    %c0_i32_1 = arith.constant 0 : i32
    return %arg0, %c0_i32, %c0_i32_0 : i32, i32, i32
  }
  func.func @transform_3(%arg0: i32) -> (i32, i32) {
    %c0_i32 = arith.constant 0 : i32
    %c0_i32_0 = arith.constant 0 : i32
    %c0_i32_1 = arith.constant 0 : i32
    return %c0_i32, %c0_i32_0 : i32, i32
  }
  func.func @transform_4(%arg0: i32) -> (i32, i32) {
    %c0_i32 = arith.constant 0 : i32
    %c0_i32_0 = arith.constant 0 : i32
    %c0_i32_1 = arith.constant 0 : i32
    return %c0_i32, %c0_i32_0 : i32, i32
  }
  func.func @transform_5(%arg0: i32) -> (i32, i32, i32) {
    %c0_i32 = arith.constant 0 : i32
    %c0_i32_0 = arith.constant 0 : i32
    %c0_i32_1 = arith.constant 0 : i32
    return %arg0, %c0_i32, %c0_i32_0 : i32, i32, i32
  }
}

</mosaic_0001>

<llo_original>
// kernel: tpu_custom_call.1
$region0: #{tpu_custom_call.1}
  #allocation0 [shape = 'u32[]', space=smem, size = 0x4, offset = 0x4, fixed_abs, tag = 'smem constant byte address 0x4 - core index']
  #allocation1 [shape = 'u32[144,128]{1,0:T(1,128)}', space=vmem, size = 0x12000, scoped, tag = 'internal scratch']
  %s0 = inlined_call_operand.vmem [shape: f32[2,4,256], index: 0, kind: input, shape index: {}]
  %s1 = inlined_call_operand.hbm [shape: f32[2,4,256], index: 1, kind: input, shape index: {}]
  %s2 = inlined_call_operand.hbm [shape: f32[2,4,256], index: 2, kind: input, shape index: {}]
  %s3 = inlined_call_operand.vmem [shape: f32[3,4], index: 3, kind: input, shape index: {}]
  %s4 = inlined_call_operand.vmem [shape: f32[12,3], index: 4, kind: input, shape index: {}]
  %s5 = inlined_call_operand.hbm [shape: f32[2,4,256], index: 5, kind: output, shape index: {}]
  %s6 = sld [smem:[#allocation0]]
  $region61: #{tpu_custom_call.1} parent=0
    _
  %s8 = ssub.s32 1, %s6
  %s9 = scalar_select 0, %s8, %s6
  $region1: #{tpu_custom_call.1} parent=0
    #allocation2 [shape = 'u8[8192]{0}', space=vmem, size = 0x2000, scoped, tag = 'input window, operand 1']
    #allocation3 [shape = 's32[2]{0}', space=sflag, size = 0x8, scoped, tag = 'scoped memory for tpu_custom_call.1']
    #allocation4 [shape = 's32[2]{0}', space=sflag, size = 0x8, scoped, tag = 'scoped memory for tpu_custom_call.1']
    #allocation5 [shape = 'u8[8192]{0}', space=vmem, size = 0x2000, scoped, tag = 'input window, operand 2']
    #allocation6 [shape = 's32[2]{0}', space=sflag, size = 0x8, scoped, tag = 'scoped memory for tpu_custom_call.1']
    #allocation7 [shape = 'u8[8192]{0}', space=vmem, size = 0x2000, scoped, tag = 'output window, operand 0']
    %10 = vsyncpa [#allocation3], 0
    %s11 = scalar_lea.sflag [#allocation3], 1
    %12 = vsyncpa %s11, 0
    %13 = vsyncpa [#allocation6], 0
    %s14 = scalar_lea.sflag [#allocation6], 1
    %15 = vsyncpa %s14, 0
    %16 = vsyncpa [#allocation4], 0
    %s17 = scalar_lea.sflag [#allocation4], 1
    %18 = vsyncpa %s17, 0
    loop: start=0, step=1, limit=4
    $region2: #{tpu_custom_call.1} parent=1 // loop_pre_header
      _
    $region3: #{tpu_custom_call.1} parent=1 // loop_header
      %s20 = sphi 0, %s24
      %p21 = scmp.ge.s32.totalorder %s20, 4
      %s30 = sphi 0, %s32
      %s33 = sphi 0, %s30
      %s34 = sphi 0, %s33
      %s50 = sphi 0, %s34
      %s56 = sphi 0, %s58
      %s59 = sphi 0, %s56
      %s60 = sphi 0, %s59
      %s76 = sphi 0, %s60
      %s82 = sphi 0, %s84
      %s85 = sphi 0, %s82
      %s86 = sphi 0, %s85
      %s102 = sphi 0, %s86
      %s106 = sphi 0, %s106
      %s108 = sphi 0, %s106
      %s109 = sphi 0, %s108
      %s123 = sphi 0, %s109
      %s127 = sphi 0, %s127
      %s129 = sphi 0, %s127
      %s130 = sphi 0, %s129
      %s144 = sphi 0, %s130
      %s150 = sphi 0, %s152
      %s153 = sphi 0, %s150
      %s154 = sphi 0, %s153
      %s170 = sphi 0, %s154
    $region4: #{tpu_custom_call.1} parent=1 // loop_header_branch
      %23 = sbr.rel (%p21) target = $region8
    $region5: #{tpu_custom_call.1} parent=1 // loop_body
      %s25 = ssub.s32 %s20, 1
      %s26 = ssub.s32 %s20, 2
      %s27 = sadd.s32 %s20, 1
      %s28 = ssub.s32 %s20, %s27
      %p29 = scmp.eq.s32.totalorder %s28, 0
      %s31 = sadd.s32 %s30, 1
      %s32 = scalar_select %p29, %s30, %s31
      %p35 = pneg %p29
      %p36 = scmp.eq.s32.totalorder %s20, 1
      %p37 = por %p35, %p36
      %p38 = scmp.ne.s32.totalorder %s30, %s33
      %p39 = scmp.eq.s32.totalorder %s20, 0
      %p40 = por %p38, %p39
      %p41 = scmp.ne.s32.totalorder %s30, %s33
      %p42 = scmp.eq.s32.totalorder %s25, 1
      %p43 = por %p41, %p42
      %p44 = scmp.ne.s32.totalorder %s33, %s34
      %p45 = scmp.eq.s32.totalorder %s25, 0
      %p46 = por %p44, %p45
      %p47 = scmp.ne.s32.totalorder %s33, %s34
      %p48 = scmp.eq.s32.totalorder %s26, 1
      %p49 = por %p47, %p48
      %p51 = scmp.ne.s32.totalorder %s34, %s50
      %p52 = scmp.eq.s32.totalorder %s26, 0
      %p53 = por %p51, %p52
      %s54 = ssub.s32 %s20, %s27
      %p55 = scmp.eq.s32.totalorder %s54, 0
      %s57 = sadd.s32 %s56, 1
      %s58 = scalar_select %p55, %s56, %s57
      %p61 = pneg %p55
      %p62 = scmp.eq.s32.totalorder %s20, 1
      %p63 = por %p61, %p62
      %p64 = scmp.ne.s32.totalorder %s56, %s59
      %p65 = scmp.eq.s32.totalorder %s20, 0
      %p66 = por %p64, %p65
      %p67 = scmp.ne.s32.totalorder %s56, %s59
      %p68 = scmp.eq.s32.totalorder %s25, 1
      %p69 = por %p67, %p68
      %p70 = scmp.ne.s32.totalorder %s59, %s60
      %p71 = scmp.eq.s32.totalorder %s25, 0
      %p72 = por %p70, %p71
      %p73 = scmp.ne.s32.totalorder %s59, %s60
      %p74 = scmp.eq.s32.totalorder %s26, 1
      %p75 = por %p73, %p74
      %p77 = scmp.ne.s32.totalorder %s60, %s76
      %p78 = scmp.eq.s32.totalorder %s26, 0
      %p79 = por %p77, %p78
      %s80 = ssub.s32 %s20, %s27
      %p81 = scmp.eq.s32.totalorder %s80, 0
      %s83 = sadd.s32 %s82, 1
      %s84 = scalar_select %p81, %s82, %s83
      %p87 = pneg %p81
      %p88 = scmp.eq.s32.totalorder %s20, 1
      %p89 = por %p87, %p88
      %p90 = scmp.ne.s32.totalorder %s82, %s85
      %p91 = scmp.eq.s32.totalorder %s20, 0
      %p92 = por %p90, %p91
      %p93 = scmp.ne.s32.totalorder %s82, %s85
      %p94 = scmp.eq.s32.totalorder %s25, 1
      %p95 = por %p93, %p94
      %p96 = scmp.ne.s32.totalorder %s85, %s86
      %p97 = scmp.eq.s32.totalorder %s25, 0
      %p98 = por %p96, %p97
      %p99 = scmp.ne.s32.totalorder %s85, %s86
      %p100 = scmp.eq.s32.totalorder %s26, 1
      %p101 = por %p99, %p100
      %p103 = scmp.ne.s32.totalorder %s86, %s102
      %p104 = scmp.eq.s32.totalorder %s26, 0
      %p105 = por %p103, %p104
      %s107 = sadd.s32 %s106, 1
      %p110 = scmp.eq.s32.totalorder %s20, 1
      %p111 = scmp.ne.s32.totalorder %s106, %s108
      %p112 = scmp.eq.s32.totalorder %s20, 0
      %p113 = por %p111, %p112
      %p114 = scmp.ne.s32.totalorder %s106, %s108
      %p115 = scmp.eq.s32.totalorder %s25, 1
      %p116 = por %p114, %p115
      %p117 = scmp.ne.s32.totalorder %s108, %s109
      %p118 = scmp.eq.s32.totalorder %s25, 0
      %p119 = por %p117, %p118
      %p120 = scmp.ne.s32.totalorder %s108, %s109
      %p121 = scmp.eq.s32.totalorder %s26, 1
      %p122 = por %p120, %p121
      %p124 = scmp.ne.s32.totalorder %s109, %s123
      %p125 = scmp.eq.s32.totalorder %s26, 0
      %p126 = por %p124, %p125
      %s128 = sadd.s32 %s127, 1
      %p131 = scmp.eq.s32.totalorder %s20, 1
      %p132 = scmp.ne.s32.totalorder %s127, %s129
      %p133 = scmp.eq.s32.totalorder %s20, 0
      %p134 = por %p132, %p133
      %p135 = scmp.ne.s32.totalorder %s127, %s129
      %p136 = scmp.eq.s32.totalorder %s25, 1
      %p137 = por %p135, %p136
      %p138 = scmp.ne.s32.totalorder %s129, %s130
      %p139 = scmp.eq.s32.totalorder %s25, 0
      %p140 = por %p138, %p139
      %p141 = scmp.ne.s32.totalorder %s129, %s130
      %p142 = scmp.eq.s32.totalorder %s26, 1
      %p143 = por %p141, %p142
      %p145 = scmp.ne.s32.totalorder %s130, %s144
      %p146 = scmp.eq.s32.totalorder %s26, 0
      %p147 = por %p145, %p146
      %s148 = ssub.s32 %s20, %s27
      %p149 = scmp.eq.s32.totalorder %s148, 0
      %s151 = sadd.s32 %s150, 1
      %s152 = scalar_select %p149, %s150, %s151
      %p155 = pneg %p149
      %p156 = scmp.eq.s32.totalorder %s20, 1
      %p157 = por %p155, %p156
      %p158 = scmp.ne.s32.totalorder %s150, %s153
      %p159 = scmp.eq.s32.totalorder %s20, 0
      %p160 = por %p158, %p159
      %p161 = scmp.ne.s32.totalorder %s150, %s153
      %p162 = scmp.eq.s32.totalorder %s25, 1
      %p163 = por %p161, %p162
      %p164 = scmp.ne.s32.totalorder %s153, %s154
      %p165 = scmp.eq.s32.totalorder %s25, 0
      %p166 = por %p164, %p165
      %p167 = scmp.ne.s32.totalorder %s153, %s154
      %p168 = scmp.eq.s32.totalorder %s26, 1
      %p169 = por %p167, %p168
      %p171 = scmp.ne.s32.totalorder %s154, %s170
      %p172 = scmp.eq.s32.totalorder %s26, 0
      %p173 = por %p171, %p172
      %p174 = scmp.le.s32.totalorder 1, %s20
      %p175 = scmp.lt.s32.totalorder %s20, 3
      %p176 = pnand %p174, %p175
      %p177 = pneg %p176
      // Predicated region
      $region9: #{tpu_custom_call.1} parent=5 // pred_check
        _
      $region10: #{tpu_custom_call.1} parent=5 // pred_check_branch
        %179 = sbr.rel (%p176) target = $region12
      $region11: #{tpu_custom_call.1} parent=5 // pred_region
        %s180 = ssub.s32 %s20, 1
        // Predicated region
        $region13: #{tpu_custom_call.1} parent=11 // pred_check
          %p181 = pneg %p119
        $region14: #{tpu_custom_call.1} parent=11 // pred_check_branch
          %183 = sbr.rel (%p181) target = $region16
        $region15: #{tpu_custom_call.1} parent=11 // pred_region
          _
        $region16: #{tpu_custom_call.1} parent=11 // pred_fallthru
          _
        // Predicated region
        $region17: #{tpu_custom_call.1} parent=11 // pred_check
          %p184 = pneg %p140
        $region18: #{tpu_custom_call.1} parent=11 // pred_check_branch
          %186 = sbr.rel (%p184) target = $region20
        $region19: #{tpu_custom_call.1} parent=11 // pred_region
          _
        $region20: #{tpu_custom_call.1} parent=11 // pred_fallthru
          _
      $region12: #{tpu_custom_call.1} parent=5 // pred_fallthru
        _
      %p187 = scmp.lt.s32.totalorder %s20, 2
      // Predicated region
      $region21: #{tpu_custom_call.1} parent=5 // pred_check
        %p188 = pneg %p187
      $region22: #{tpu_custom_call.1} parent=5 // pred_check_branch
        %190 = sbr.rel (%p188) target = $region24
      $region23: #{tpu_custom_call.1} parent=5 // pred_region
        // Predicated region
        $region25: #{tpu_custom_call.1} parent=23 // pred_check
          %p191 = pneg %p40
        $region26: #{tpu_custom_call.1} parent=23 // pred_check_branch
          %193 = sbr.rel (%p191) target = $region28
        $region27: #{tpu_custom_call.1} parent=23 // pred_region
          %p194 = scmp.lt.s32.totalorder %s20, 1
          %s195 = scalar_select %p194, %s20, 1
          %s196 = smul.addr %s195, 2
          %s197 = smul.addr %s196, 4
          %s198 = scalar_lea.vmem %s0, %s197
        $region28: #{tpu_custom_call.1} parent=23 // pred_fallthru
          _
        // Predicated region
        $region29: #{tpu_custom_call.1} parent=23 // pred_check
          %p199 = pneg %p66
        $region30: #{tpu_custom_call.1} parent=23 // pred_check_branch
          %201 = sbr.rel (%p199) target = $region32
        $region31: #{tpu_custom_call.1} parent=23 // pred_region
          %s202 = sand.u32 %s56, 1
          %s203 = scalar_lea.sflag [#allocation3], %s202
          %s204 = sand.u32 %s56, 1
          %s205 = smul.addr %s204, 8
          %s206 = scalar_lea.vmem [#allocation2], %s205
          %s208 = ssub.s32 128, 128
          %209 = vsyncadd %s203, %s208
          %s210 = smul.addr %s20, 2
          %s211 = smul.addr %s210, 64
          %s212 = scalar_lea.hbm %s1, %s211
          %s214 = sshll.u32 %s206, 4
          %s215 = int_to_ptr.vmem [resolvable:$true] %s214
          %217 = dma.hbm_to_vmem [thread:$0]  %s212, 128, %s215, %s203
        $region32: #{tpu_custom_call.1} parent=23 // pred_fallthru
          _
        // Predicated region
        $region33: #{tpu_custom_call.1} parent=23 // pred_check
          %p218 = pneg %p92
        $region34: #{tpu_custom_call.1} parent=23 // pred_check_branch
          %220 = sbr.rel (%p218) target = $region36
        $region35: #{tpu_custom_call.1} parent=23 // pred_region
          %s221 = sand.u32 %s82, 1
          %s222 = scalar_lea.sflag [#allocation6], %s221
          %s223 = sand.u32 %s82, 1
          %s224 = smul.addr %s223, 8
          %s225 = scalar_lea.vmem [#allocation5], %s224
          %s227 = ssub.s32 128, 128
          %228 = vsyncadd %s222, %s227
          %s229 = smul.addr %s20, 2
          %s230 = smul.addr %s229, 64
          %s231 = scalar_lea.hbm %s2, %s230
          %s233 = sshll.u32 %s225, 4
          %s234 = int_to_ptr.vmem [resolvable:$true] %s233
          %236 = dma.hbm_to_vmem [thread:$0]  %s231, 128, %s234, %s222
        $region36: #{tpu_custom_call.1} parent=23 // pred_fallthru
          _
      $region24: #{tpu_custom_call.1} parent=5 // pred_fallthru
        _
      %p237 = scmp.le.s32.totalorder 1, %s20
      %p238 = scmp.lt.s32.totalorder %s20, 3
      %p239 = pnand %p237, %p238
      %p240 = pneg %p239
      // Predicated region
      $region37: #{tpu_custom_call.1} parent=5 // pred_check
        _
      $region38: #{tpu_custom_call.1} parent=5 // pred_check_branch
        %242 = sbr.rel (%p239) target = $region40
      $region39: #{tpu_custom_call.1} parent=5 // pred_region
        %s243 = ssub.s32 %s20, 1
        %s244 = sand.u32 %s59, 1
        %s245 = scalar_lea.sflag [#allocation3], %s244
        %s246 = sand.u32 %s59, 1
        %s247 = smul.addr %s246, 8
        %s248 = scalar_lea.vmem [#allocation2], %s247
        // Predicated region
        $region41: #{tpu_custom_call.1} parent=39 // pred_check
          %p249 = pneg %p72
        $region42: #{tpu_custom_call.1} parent=39 // pred_check_branch
          %251 = sbr.rel (%p249) target = $region44
        $region43: #{tpu_custom_call.1} parent=39 // pred_region
          %252 = dma.done %s245, 128
        $region44: #{tpu_custom_call.1} parent=39 // pred_fallthru
          _
        %s253 = sand.u32 %s85, 1
        %s254 = scalar_lea.sflag [#allocation6], %s253
        %s255 = sand.u32 %s85, 1
        %s256 = smul.addr %s255, 8
        %s257 = scalar_lea.vmem [#allocation5], %s256
        // Predicated region
        $region45: #{tpu_custom_call.1} parent=39 // pred_check
          %p258 = pneg %p98
        $region46: #{tpu_custom_call.1} parent=39 // pred_check_branch
          %260 = sbr.rel (%p258) target = $region48
        $region47: #{tpu_custom_call.1} parent=39 // pred_region
          %261 = dma.done %s254, 128
        $region48: #{tpu_custom_call.1} parent=39 // pred_fallthru
          _
        %p262 = scmp.lt.s32.totalorder %s25, 1
        %s263 = scalar_select %p262, %s25, 1
        %s264 = smul.addr %s263, 2
        %s265 = smul.addr %s264, 4
        %s266 = scalar_lea.vmem %s0, %s265
        %p267 = pneg %p46
        %p268 = pneg %p43
        %s269 = sand.u32 %s59, 1
        %s270 = scalar_lea.sflag [#allocation3], %s269
        %s271 = sand.u32 %s59, 1
        %s272 = smul.addr %s271, 8
        %s273 = scalar_lea.vmem [#allocation2], %s272
        %p274 = pneg %p72
        %p275 = pneg %p69
        %s276 = sand.u32 %s85, 1
        %s277 = scalar_lea.sflag [#allocation6], %s276
        %s278 = sand.u32 %s85, 1
        %s279 = smul.addr %s278, 8
        %s280 = scalar_lea.vmem [#allocation5], %s279
        %p281 = pneg %p98
        %p282 = pneg %p95
        %p283 = pneg %p119
        %p284 = pneg %p116
        %p285 = pneg %p140
        %p286 = pneg %p137
        %p287 = pneg %p166
        %p288 = pneg %p163
        %s289 = sand.u32 %s153, 1
        %s290 = scalar_lea.sflag [#allocation4], %s289
        %s291 = sand.u32 %s153, 1
        %s292 = smul.addr %s291, 8
        %s293 = scalar_lea.vmem [#allocation7], %s292
        %p294 = scmp.lt.s32.totalorder %s25, 1
        %s295 = scalar_select %p294, %s25, 1
        %s296 = smul.addr %s295, 2
        %s297 = smul.addr %s296, 4
        %s298 = scalar_lea.vmem %s0, %s297
        %v299 = vld [vmem:[%s298] sm:$0xff]
        %v301 = vcombine.high %v299, %v299
        %vm303 = vcmask 1043456
        %v304 = vsel %vm303, %v299, 0.0
        %v305 = vsel %vm303, %v301, 0.0
        %v306 = vadd.f32 %v304, %v305
        %307 = vadd.xlane.f32.xlu0 %v306
        %v308 = vpop.xlane.xlu0 %307
        %v309 = vld [vmem:[%s248] sm:$0xff]
        %v311 = vcombine.high %v309, %v309
        %v313 = vsel %vm303, %v309, 0.0
        %v314 = vsel %vm303, %v311, 0.0
        %v315 = vadd.f32 %v313, %v314
        %316 = vadd.xlane.f32.xlu0 %v315
        %v317 = vpop.xlane.xlu0 %316
        %v318 = vadd.f32 %v308, %v317
        %v319 = vld [vmem:[%s257] sm:$0xff]
        %v321 = vcombine.high %v319, %v319
        %v323 = vsel %vm303, %v319, 0.0
        %v324 = vsel %vm303, %v321, 0.0
        %v325 = vadd.f32 %v323, %v324
        %326 = vadd.xlane.f32.xlu0 %v325
        %v327 = vpop.xlane.xlu0 %326
        %v328 = vadd.f32 %v318, %v327
        %v329 = vmul.f32 %v328, 0.00390625
        %v330 = vld [vmem:[%s3] sm:$0x7]
        %vm331 = vcmask 31744
        %v333 = vsel %vm331, %v330, 0
        %v336 = vsel %vm303, %v329, 0
        %338 = vmatprep.subr.mxu0 0.0
        %339 = vmatpush1.msra.mxu0 %v336
        %340 = vmatprep.subr.mxu0 0.0
        %341 = vmatpush1.msra.mxu0 0.0
        %342 = vmatprep.subr.mxu0 0.0
        %343 = vmatpush1.msra.mxu0 0.0
        %344 = vmatprep.subr.mxu0 0.0
        %345 = vmatpush1.msra.mxu0 0.0
        %346 = vmatprep.subr.mxu0 0.0
        %347 = vmatpush1.msra.mxu0 0.0
        %348 = vmatprep.subr.mxu0 0.0
        %349 = vmatpush1.msra.mxu0 0.0
        %350 = vmatprep.subr.mxu0 0.0
        %351 = vmatpush1.msra.mxu0 0.0
        %352 = vmatprep.subr.mxu0 0.0
        %353 = vmatpush1.msra.mxu0 0.0
        %354 = vmatprep.subr.mxu0 0.0
        %355 = vmatpush1.msra.mxu0 0.0
        %356 = vmatprep.subr.mxu0 0.0
        %357 = vmatpush1.msra.mxu0 0.0
        %358 = vmatprep.subr.mxu0 0.0
        %359 = vmatpush1.msra.mxu0 0.0
        %360 = vmatprep.subr.mxu0 0.0
        %361 = vmatpush1.msra.mxu0 0.0
        %362 = vmatprep.subr.mxu0 0.0
        %363 = vmatpush1.msra.mxu0 0.0
        %364 = vmatprep.subr.mxu0 0.0
        %365 = vmatpush1.msra.mxu0 0.0
        %366 = vmatprep.subr.mxu0 0.0
        %367 = vmatpush1.msra.mxu0 0.0
        %368 = vmatprep.subr.mxu0 0.0
        %369 = vmatpush1.msra.mxu0 0.0
        %370 = vmatprep.subr.mxu0 0.0
        %371 = vmatpush1.msra.mxu0 0.0
        %372 = vmatprep.subr.mxu0 0.0
        %373 = vmatpush1.msra.mxu0 0.0
        %374 = vmatprep.subr.mxu0 0.0
        %375 = vmatpush1.msra.mxu0 0.0
        %376 = vmatprep.subr.mxu0 0.0
        %377 = vmatpush1.msra.mxu0 0.0
        %378 = vmatprep.subr.mxu0 0.0
        %379 = vmatpush1.msra.mxu0 0.0
        %380 = vmatprep.subr.mxu0 0.0
        %381 = vmatpush1.msra.mxu0 0.0
        %382 = vmatprep.subr.mxu0 0.0
        %383 = vmatpush1.msra.mxu0 0.0
        %384 = vmatprep.subr.mxu0 0.0
        %385 = vmatpush1.msra.mxu0 0.0
        %386 = vmatprep.subr.mxu0 0.0
        %387 = vmatpush1.msra.mxu0 0.0
        %388 = vmatprep.subr.mxu0 0.0
        %389 = vmatpush1.msra.mxu0 0.0
        %390 = vmatprep.subr.mxu0 0.0
        %391 = vmatpush1.msra.mxu0 0.0
        %392 = vmatprep.subr.mxu0 0.0
        %393 = vmatpush1.msra.mxu0 0.0
        %394 = vmatprep.subr.mxu0 0.0
        %395 = vmatpush1.msra.mxu0 0.0
        %396 = vmatprep.subr.mxu0 0.0
        %397 = vmatpush1.msra.mxu0 0.0
        %398 = vmatprep.subr.mxu0 0.0
        %399 = vmatpush1.msra.mxu0 0.0
        %400 = vmatprep.subr.mxu0 0.0
        %401 = vmatpush1.msra.mxu0 0.0
        %402 = vmatprep.mubr.f32.mxu0 0.0
        %403 = vmatmul.mubr.f32.gmra.mrb[0].mxu0 %v333
        %v404 = vpop.f32.mrb[0].mxu0
        %v405 = vadd.f32 0.0, %v404
        %v406 = vpop.f32.mrb[0].mxu0
        %407 = vdwg.mxu0
        %v408 = vmul.f32 %v405, 0.5
        %v409 = vmul.f32 %v405, 0.70710677
        %v410 = verf.f32.pop %v409
        %v411 = vadd.f32 %v410, 1.0
        %v412 = vmul.f32 %v408, %v411
        %v413 = vld [vmem:[%s4] sm:$0xff]
        %v414 = vld [vmem:[%s4 + $0x8] sm:$0xf]
        %vm415 = vcmask 23552
        %v417 = vsel %vm415, %v413, 0
        %v420 = vsel %vm415, %v414, 0
        %vm422 = vcmask 1042432
        %v424 = vsel %vm422, %v412, 0
        %426 = vmatprep.subr.mxu0 0.0
        %427 = vmatpush1.msra.mxu0 %v424
        %428 = vmatprep.subr.mxu0 0.0
        %429 = vmatpush1.msra.mxu0 0.0
        %430 = vmatprep.subr.mxu0 0.0
        %431 = vmatpush1.msra.mxu0 0.0
        %432 = vmatprep.subr.mxu0 0.0
        %433 = vmatpush1.msra.mxu0 0.0
        %434 = vmatprep.subr.mxu0 0.0
        %435 = vmatpush1.msra.mxu0 0.0
        %436 = vmatprep.subr.mxu0 0.0
        %437 = vmatpush1.msra.mxu0 0.0
        %438 = vmatprep.subr.mxu0 0.0
        %439 = vmatpush1.msra.mxu0 0.0
        %440 = vmatprep.subr.mxu0 0.0
        %441 = vmatpush1.msra.mxu0 0.0
        %442 = vmatprep.subr.mxu0 0.0
        %443 = vmatpush1.msra.mxu0 0.0
        %444 = vmatprep.subr.mxu0 0.0
        %445 = vmatpush1.msra.mxu0 0.0
        %446 = vmatprep.subr.mxu0 0.0
        %447 = vmatpush1.msra.mxu0 0.0
        %448 = vmatprep.subr.mxu0 0.0
        %449 = vmatpush1.msra.mxu0 0.0
        %450 = vmatprep.subr.mxu0 0.0
        %451 = vmatpush1.msra.mxu0 0.0
        %452 = vmatprep.subr.mxu0 0.0
        %453 = vmatpush1.msra.mxu0 0.0
        %454 = vmatprep.subr.mxu0 0.0
        %455 = vmatpush1.msra.mxu0 0.0
        %456 = vmatprep.subr.mxu0 0.0
        %457 = vmatpush1.msra.mxu0 0.0
        %458 = vmatprep.subr.mxu0 0.0
        %459 = vmatpush1.msra.mxu0 0.0
        %460 = vmatprep.subr.mxu0 0.0
        %461 = vmatpush1.msra.mxu0 0.0
        %462 = vmatprep.subr.mxu0 0.0
        %463 = vmatpush1.msra.mxu0 0.0
        %464 = vmatprep.subr.mxu0 0.0
        %465 = vmatpush1.msra.mxu0 0.0
        %466 = vmatprep.subr.mxu0 0.0
        %467 = vmatpush1.msra.mxu0 0.0
        %468 = vmatprep.subr.mxu0 0.0
        %469 = vmatpush1.msra.mxu0 0.0
        %470 = vmatprep.subr.mxu0 0.0
        %471 = vmatpush1.msra.mxu0 0.0
        %472 = vmatprep.subr.mxu0 0.0
        %473 = vmatpush1.msra.mxu0 0.0
        %474 = vmatprep.subr.mxu0 0.0
        %475 = vmatpush1.msra.mxu0 0.0
        %476 = vmatprep.subr.mxu0 0.0
        %477 = vmatpush1.msra.mxu0 0.0
        %478 = vmatprep.subr.mxu0 0.0
        %479 = vmatpush1.msra.mxu0 0.0
        %480 = vmatprep.subr.mxu0 0.0
        %481 = vmatpush1.msra.mxu0 0.0
        %482 = vmatprep.subr.mxu0 0.0
        %483 = vmatpush1.msra.mxu0 0.0
        %484 = vmatprep.subr.mxu0 0.0
        %485 = vmatpush1.msra.mxu0 0.0
        %486 = vmatprep.subr.mxu0 0.0
        %487 = vmatpush1.msra.mxu0 0.0
        %488 = vmatprep.subr.mxu0 0.0
        %489 = vmatpush1.msra.mxu0 0.0
        %490 = vmatprep.mubr.f32.mxu0 0.0
        %491 = vmatmul.mubr.f32.gmra.mrb[0].mxu0 %v417
        %v492 = vpop.f32.mrb[0].mxu0
        %v493 = vadd.f32 0.0, %v492
        %v494 = vpop.f32.mrb[0].mxu0
        %495 = vmatprep.mubr.f32.mxu0 0.0
        %496 = vmatmul.mubr.f32.gmra.mrb[0].mxu0 %v420
        %v497 = vpop.f32.mrb[0].mxu0
        %v498 = vadd.f32 0.0, %v497
        %v499 = vpop.f32.mrb[0].mxu0
        %500 = vdwg.mxu0
        %v502 = vrot.slane %v493, 4
        %v504 = vmax.f32 %v493, %v502
        %v505 = vmax.f32 %v504, %v498
        %v506 = vsub.f32 %v493, %v505
        %v507 = vmul.f32 %v506, 1.442695
        %v508 = vpow.pop %v507
        %v510 = vrot.slane %v505, 4
        %v512 = vsub.f32 %v493, %v510
        %v513 = vmul.f32 %v512, 1.442695
        %v514 = vpow.pop %v513
        %v515 = vsub.f32 %v498, %v505
        %v516 = vmul.f32 %v515, 1.442695
        %v517 = vpow.pop %v516
        %v519 = vrot.slane %v514, 4
        %v521 = vadd.f32 %v508, %v519
        %v522 = vadd.f32 %v521, %v517
        %v523 = vrcp.pop %v522
        %v524 = vmul.f32 1.0, %v523
        %v525 = vmul.f32 %v508, %v524
        %v527 = vrot.slane %v524, 4
        %v529 = vmul.f32 %v514, %v527
        %v530 = vmul.f32 %v517, %v524
        %532 = vset.pattern.permute.xlu0 0
        %533 = vperm.xlu0 %532, %v525
        %v534 = vpop.permute.xlu0 %533
        %v536 = vmul.f32 %v534, %v299
        %v537 = vmul.f32 %v534, %v301
        %539 = vset.pattern.permute.xlu0 0
        %540 = vperm.xlu0 %539, %v529
        %v541 = vpop.permute.xlu0 %540
        %v543 = vcombine.low %v309, %v309
        %v545 = vmul.f32 %v541, %v543
        %v546 = vmul.f32 %v541, %v309
        %v549 = vrot.slane %v545, 4
        %v550 = vrot.slane %v546, 4
        %v553 = vadd.f32 %v536, %v549
        %v554 = vadd.f32 %v537, %v550
        %556 = vset.pattern.permute.xlu0 0
        %557 = vperm.xlu0 %556, %v530
        %v558 = vpop.permute.xlu0 %557
        %v560 = vmul.f32 %v558, %v319
        %v561 = vmul.f32 %v558, %v321
        %v562 = vadd.f32 %v553, %v560
        %v563 = vadd.f32 %v554, %v561
        %v566 = vcombine.low %v562, %v563
        %568 = vst [vmem:[%s293] sm:$0xff] %v566
        %s569 = sand.u32 %s153, 1
        %s570 = scalar_lea.sflag [#allocation4], %s569
        %s571 = sand.u32 %s153, 1
        %s572 = smul.addr %s571, 8
        %s573 = scalar_lea.vmem [#allocation7], %s572
        // Predicated region
        $region49: #{tpu_custom_call.1} parent=39 // pred_check
          %p574 = pneg %p163
        $region50: #{tpu_custom_call.1} parent=39 // pred_check_branch
          %576 = sbr.rel (%p574) target = $region52
        $region51: #{tpu_custom_call.1} parent=39 // pred_region
          %s578 = ssub.s32 128, 128
          %579 = vsyncadd %s570, %s578
          %s580 = smul.addr %s25, 2
          %s581 = smul.addr %s580, 64
          %s582 = scalar_lea.hbm %s5, %s581
          %s584 = sshll.u32 %s573, 4
          %s585 = int_to_ptr.vmem [resolvable:$true] %s584
          %587 = dma.vmem_to_hbm [thread:$0]  %s585, 128, %s582, %s570
        $region52: #{tpu_custom_call.1} parent=39 // pred_fallthru
          _
      $region40: #{tpu_custom_call.1} parent=5 // pred_fallthru
        _
      %p588 = scmp.le.s32.totalorder 2, %s20
      // Predicated region
      $region53: #{tpu_custom_call.1} parent=5 // pred_check
        %p589 = pneg %p588
      $region54: #{tpu_custom_call.1} parent=5 // pred_check_branch
        %591 = sbr.rel (%p589) target = $region56
      $region55: #{tpu_custom_call.1} parent=5 // pred_region
        %s592 = ssub.s32 %s20, 2
        // Predicated region
        $region57: #{tpu_custom_call.1} parent=55 // pred_check
          %p593 = pneg %p169
        $region58: #{tpu_custom_call.1} parent=55 // pred_check_branch
          %595 = sbr.rel (%p593) target = $region60
        $region59: #{tpu_custom_call.1} parent=55 // pred_region
          %s596 = sand.u32 %s154, 1
          %s597 = scalar_lea.sflag [#allocation4], %s596
          %s598 = sand.u32 %s154, 1
          %s599 = smul.addr %s598, 8
          %s600 = scalar_lea.vmem [#allocation7], %s599
          %601 = dma.done %s597, 128
        $region60: #{tpu_custom_call.1} parent=55 // pred_fallthru
          _
      $region56: #{tpu_custom_call.1} parent=5 // pred_fallthru
        _
    $region6: #{tpu_custom_call.1} parent=1 // loop_footer
      %s24 = sadd.s32 1, %s20
    $region7: #{tpu_custom_call.1} parent=1 // loop_footer_branch
      %19 = sbr.rel target = $region3
    $region8: #{tpu_custom_call.1} parent=1 // loop_exit
      _
    %602 = vsyncpa [#allocation3], 1
    %s603 = scalar_lea.sflag [#allocation3], 1
    %604 = vsyncpa %s603, 1
    %605 = vsyncpa [#allocation6], 1
    %s606 = scalar_lea.sflag [#allocation6], 1
    %607 = vsyncpa %s606, 1
    %608 = vsyncpa [#allocation4], 1
    %s609 = scalar_lea.sflag [#allocation4], 1
    %610 = vsyncpa %s609, 1

</llo_original>
